<compile_context>
chip_gen: v7x
topology: tpu7x:2x2x1
jax: 0.10.0
libtpu: 0.0.40
codegen_flags: <defaults>
</compile_context>

<pallas_src>
import functools

import jax
import jax.numpy as jnp
from jax.experimental import pallas as pl
from jax.experimental.pallas import tpu as pltpu


def _adaptive_loss_kernel(coef_ref, nl_ref, dl_ref, tg_ref, sc_ref,
                          out_ref, acc_ref, *, batch, inv_b):
    """One grid step over a batch tile.

    coef_ref : SMEM f32[3]   [alpha, curr_beta, curr_gamma] (host-precomputed)
    nl_ref   : VMEM (TB, Cn) nurse logits (native dtype, cast in-kernel)
    dl_ref   : VMEM (TB, Cd) doctor logits
    tg_ref   : VMEM (TB, 2)  int32 [nurse_target, doctor_target]
    sc_ref   : VMEM (TB, 5)  f32  [wait_pred, wait_tgt, patient_loss, overload, tmax]
    out_ref  : SMEM f32[8]   [total, nurse, doctor, wait, lp_mean, ov_mean, cb, cg]
    acc_ref  : SMEM f32[8]   running sums across grid steps (7 slots used)
    """
    pid = pl.program_id(0)
    nsteps = pl.num_programs(0)

    @pl.when(pid == 0)
    def _init():
        for k in range(8):
            acc_ref[k] = jnp.float32(0.0)

    nl = nl_ref[...].astype(jnp.float32)
    dl = dl_ref[...].astype(jnp.float32)
    tg = tg_ref[...]
    sc = sc_ref[...].astype(jnp.float32)

    tb = nl.shape[0]
    cmax = max(nl.shape[1], dl.shape[1])

    # Row-validity mask for a ragged final tile. Padded rows may hold garbage
    # (possibly NaN/inf), so mask with jnp.where, not multiply-by-mask.
    row = pid * tb + jax.lax.broadcasted_iota(jnp.int32, (tb, 1), 0)
    valid = row < batch

    # Single class-iota shared by both cross-entropy terms.
    iota_c = jax.lax.broadcasted_iota(jnp.int32, (tb, cmax), 1)

    def ce_block_sum(logits, tgt):
        # Sum over rows of CE(logits, tgt) for this tile (mean taken at the end).
        # Out-of-range targets contribute tgt_logit = 0 (documented deviation
        # from torch's index semantics; targets are in-range here).
        c = logits.shape[1]
        io = iota_c if c == cmax else iota_c[:, :c]
        m = jnp.max(logits, axis=-1, keepdims=True)
        lse = m + jnp.log(jnp.sum(jnp.exp(logits - m), axis=-1, keepdims=True))
        tgt_logit = jnp.sum(jnp.where(io == tgt, logits, 0.0),
                            axis=-1, keepdims=True)
        return jnp.sum(jnp.where(valid, lse - tgt_logit, 0.0))

    nurse_sum = ce_block_sum(nl, tg[:, 0:1])
    doctor_sum = ce_block_sum(dl, tg[:, 1:2])

    wp, wt = sc[:, 0:1], sc[:, 1:2]
    pls, ov = sc[:, 2:3], sc[:, 3:4]
    tmax = sc[:, 4:5]

    diff = wp - wt
    wait_sum = jnp.sum(jnp.where(valid, diff * diff, 0.0))

    tv = jnp.maximum(diff, 0.0)                              # relu(wp - wt)
    severe = (tv > 0.2 * tmax).astype(jnp.float32)
    time_pen = (1.0 + 2.0 * severe) * tv
    vmask = jnp.logical_or(pls > 0.0, ov > 0.0).astype(jnp.float32)
    bw = 1.0 + 1.5 * vmask

    time_sum = jnp.sum(jnp.where(valid, bw * time_pen, 0.0))
    pen_sum = jnp.sum(jnp.where(valid, bw * (pls + ov), 0.0))
    pls_sum = jnp.sum(jnp.where(valid, pls, 0.0))
    ov_sum = jnp.sum(jnp.where(valid, ov, 0.0))

    acc_ref[0] += nurse_sum
    acc_ref[1] += doctor_sum
    acc_ref[2] += wait_sum
    acc_ref[3] += time_sum
    acc_ref[4] += pen_sum
    acc_ref[5] += pls_sum
    acc_ref[6] += ov_sum

    @pl.when(pid == nsteps - 1)
    def _finalize():
        alpha = coef_ref[0]
        cb = coef_ref[1]
        cg = coef_ref[2]
        nurse = acc_ref[0] * inv_b
        doctor = acc_ref[1] * inv_b
        wait = acc_ref[2] * inv_b
        time_term = acc_ref[3] * inv_b
        pen_term = acc_ref[4] * inv_b
        out_ref[0] = (alpha * (nurse + doctor + wait)
                      + cb * time_term + cg * pen_term)
        out_ref[1] = nurse
        out_ref[2] = doctor
        out_ref[3] = wait
        out_ref[4] = acc_ref[5] * inv_b
        out_ref[5] = acc_ref[6] * inv_b
        out_ref[6] = cb
        out_ref[7] = cg


def adaptive_loss(nurse_logits, doctor_logits, wait_time_pred,
                  nurse_targets, doctor_targets, wait_time_targets,
                  patient_loss, hospital_overload, features,
                  alpha=1.0, beta=1.0, gamma=1.0, epoch=0):
    # TODO(synk): the features=None fallback branch of the PyTorch module is
    # not implemented in the kernel; this wrapper requires features.
    B, NC = nurse_logits.shape
    DC = doctor_logits.shape[1]

    # Host-side scalar prep: ship only the 3 final coefficients.
    curr_beta = beta * (1.0 + 0.05 * epoch)
    curr_gamma = gamma * (1.0 + 0.03 * epoch)
    coef = jnp.asarray([alpha, curr_beta, curr_gamma], dtype=jnp.float32)

    # Pack per-sample scalars into one lane-dense slab: [wp, wt, ploss, over, tmax].
    slab = jnp.concatenate([
        wait_time_pred.reshape(B, 1).astype(jnp.float32),
        wait_time_targets.reshape(B, 1).astype(jnp.float32),
        patient_loss.reshape(B, 1).astype(jnp.float32),
        hospital_overload.reshape(B, 1).astype(jnp.float32),
        features[:, 6:7].astype(jnp.float32),
    ], axis=1)                                                   # (B, 5) f32
    targets = jnp.stack([nurse_targets.astype(jnp.int32),
                         doctor_targets.astype(jnp.int32)], axis=1)  # (B, 2)

    # Batch tiling: one full-batch block when it trivially fits, otherwise
    # 1024-row tiles (multiple of 8 sublanes) with a masked ragged tail.
    # TODO(synk): on v7x (2 TCs, 64 MiB VMEM) halve the tile and/or add a
    # core-parallel leading grid axis; unnecessary at these class counts.
    tile = B if B <= 1024 else 1024
    grid = (pl.cdiv(B, tile),)

    kernel = functools.partial(_adaptive_loss_kernel, batch=B, inv_b=1.0 / B)

    itemsize = jnp.dtype(nurse_logits.dtype).itemsize
    cost = pl.CostEstimate(
        flops=8 * B * (NC + DC) + 32 * B,
        transcendentals=B * (NC + DC) + 2 * B,
        bytes_accessed=itemsize * B * (NC + DC) + 4 * (7 * B + 8 + 3),
    )

    out = pl.pallas_call(
        kernel,
        out_shape=jax.ShapeDtypeStruct((8,), jnp.float32),
        grid=grid,
        in_specs=[
            pl.BlockSpec(memory_space=pltpu.MemorySpace.SMEM),     # coef
            pl.BlockSpec((tile, NC), lambda i: (i, 0)),            # nurse logits
            pl.BlockSpec((tile, DC), lambda i: (i, 0)),            # doctor logits
            pl.BlockSpec((tile, 2), lambda i: (i, 0)),             # int targets
            pl.BlockSpec((tile, 5), lambda i: (i, 0)),             # scalar slab
        ],
        out_specs=pl.BlockSpec(memory_space=pltpu.MemorySpace.SMEM),
        scratch_shapes=[pltpu.SMEM((8,), jnp.float32)],
        compiler_params=pltpu.CompilerParams(
            dimension_semantics=("arbitrary",)),
        cost_estimate=cost,
    )(coef, nurse_logits, doctor_logits, targets, slab)

    total = out[0]
    stats = {
        "nurse_loss": out[1],
        "doctor_loss": out[2],
        "wait_time_loss": out[3],
        "loss_penalty": out[4],
        "overload_penalty": out[5],
        "curr_beta": out[6],
        "curr_gamma": out[7],
        "epoch": epoch,
    }
    return total, stats


def reference_loss(nurse_logits, doctor_logits, wait_time_pred,
                   nurse_targets, doctor_targets, wait_time_targets,
                   patient_loss, hospital_overload, features,
                   alpha=1.0, beta=1.0, gamma=1.0, epoch=0):
    # Pure-JAX mirror of the PyTorch forward (features is not None branch).
    def ce(logits, tgt):
        lse = jax.scipy.special.logsumexp(logits, axis=-1)
        tgt_logit = jnp.take_along_axis(logits, tgt[:, None], axis=-1)[:, 0]
        return jnp.mean(lse - tgt_logit)

    nurse_loss = ce(nurse_logits, nurse_targets)
    doctor_loss = ce(doctor_logits, doctor_targets)
    wp = wait_time_pred.reshape(-1)
    wait_loss = jnp.mean((wp - wait_time_targets) ** 2)
    curr_beta = beta * (1 + 0.05 * epoch)
    curr_gamma = gamma * (1 + 0.03 * epoch)
    tmax = features[:, 6]
    tv = jnp.maximum(wp - wait_time_targets, 0.0)
    severe = (tv > 0.2 * tmax).astype(jnp.float32)
    time_penalty = (1 + severe * 2) * tv
    lp = patient_loss.astype(jnp.float32)
    op = hospital_overload.astype(jnp.float32)
    vmask = jnp.logical_or(patient_loss > 0, hospital_overload > 0).astype(jnp.float32)
    bw = 1.0 + vmask * 1.5
    total = (alpha * (nurse_loss + doctor_loss + wait_loss)
             + curr_beta * jnp.mean(bw * time_penalty)
             + curr_gamma * jnp.mean(bw * (lp + op)))
    return total


if __name__ == "__main__":
    key = jax.random.PRNGKey(0)
    B, NC, DC, F = 8, 5, 4, 8
    ks = jax.random.split(key, 9)

    nurse_logits = jax.random.normal(ks[0], (B, NC), jnp.float32)
    doctor_logits = jax.random.normal(ks[1], (B, DC), jnp.float32)
    wait_time_pred = jax.random.uniform(ks[2], (B, 1), jnp.float32, 0.0, 2.0)
    nurse_targets = jax.random.randint(ks[3], (B,), 0, NC, jnp.int32)
    doctor_targets = jax.random.randint(ks[4], (B,), 0, DC, jnp.int32)
    wait_time_targets = jax.random.uniform(ks[5], (B,), jnp.float32, 0.0, 2.0)
    patient_loss = (jax.random.uniform(ks[6], (B,)) < 0.3).astype(jnp.float32)
    hospital_overload = (jax.random.uniform(ks[7], (B,)) < 0.3).astype(jnp.float32)
    features = jax.random.uniform(ks[8], (B, F), jnp.float32, 0.1, 3.0)

    epoch = 3
    total, stats = adaptive_loss(
        nurse_logits, doctor_logits, wait_time_pred,
        nurse_targets, doctor_targets, wait_time_targets,
        patient_loss, hospital_overload, features,
        alpha=1.0, beta=1.0, gamma=1.0, epoch=epoch)
    total = jax.block_until_ready(total)

    ref = reference_loss(
        nurse_logits, doctor_logits, wait_time_pred,
        nurse_targets, doctor_targets, wait_time_targets,
        patient_loss, hospital_overload, features,
        alpha=1.0, beta=1.0, gamma=1.0, epoch=epoch)

    assert jnp.allclose(total, ref, rtol=1e-5, atol=1e-5), (total, ref)
    print("KERNEL_OK")
</pallas_src>

<mosaic_0001>
module attributes {stable_mosaic.version = 11 : i64} {
  func.func @_adaptive_loss_kernel(%arg0: i32, %arg1: memref<3xf32, #tpu.memory_space<smem>>, %arg2: memref<8x5xf32, #tpu.memory_space<vmem>>, %arg3: memref<8x4xf32, #tpu.memory_space<vmem>>, %arg4: memref<8x2xi32, #tpu.memory_space<vmem>>, %arg5: memref<8x5xf32, #tpu.memory_space<vmem>>, %arg6: memref<8xf32, #tpu.memory_space<smem>>, %arg7: memref<8xf32, #tpu.memory_space<smem>>) attributes {dimension_semantics = [#tpu.dimension_semantics<arbitrary>], iteration_bounds = array<i64: 1>, scalar_prefetch = 0 : i64, scratch_operands = 1 : i64, tpu.core_type = #tpu.core_type<tc>, window_params = [{transform_indices = @transform_0, window_bounds = array<i64: 3>}, {transform_indices = @transform_1, window_bounds = array<i64: 8, 5>}, {transform_indices = @transform_2, window_bounds = array<i64: 8, 4>}, {transform_indices = @transform_3, window_bounds = array<i64: 8, 2>}, {transform_indices = @transform_4, window_bounds = array<i64: 8, 5>}, {transform_indices = @transform_5, window_bounds = array<i64: 8>}]} {
    %c0_i32 = arith.constant 0 : i32
    %0 = arith.cmpi eq, %arg0, %c0_i32 : i32
    %1 = arith.extui %0 : i1 to i32
    %c0_i32_0 = arith.constant 0 : i32
    %2 = arith.cmpi ne, %1, %c0_i32_0 : i32
    scf.if %2 {
      %cst_48 = arith.constant 0.000000e+00 : f32
      %c0_49 = arith.constant 0 : index
      %148 = memref.load %arg7[%c0_49] : memref<8xf32, #tpu.memory_space<smem>>
      memref.store %cst_48, %arg7[%c0_49] : memref<8xf32, #tpu.memory_space<smem>>
      %cst_50 = arith.constant 0.000000e+00 : f32
      %c1_51 = arith.constant 1 : index
      %149 = memref.load %arg7[%c1_51] : memref<8xf32, #tpu.memory_space<smem>>
      memref.store %cst_50, %arg7[%c1_51] : memref<8xf32, #tpu.memory_space<smem>>
      %cst_52 = arith.constant 0.000000e+00 : f32
      %c2_53 = arith.constant 2 : index
      %150 = memref.load %arg7[%c2_53] : memref<8xf32, #tpu.memory_space<smem>>
      memref.store %cst_52, %arg7[%c2_53] : memref<8xf32, #tpu.memory_space<smem>>
      %cst_54 = arith.constant 0.000000e+00 : f32
      %c3_55 = arith.constant 3 : index
      %151 = memref.load %arg7[%c3_55] : memref<8xf32, #tpu.memory_space<smem>>
      memref.store %cst_54, %arg7[%c3_55] : memref<8xf32, #tpu.memory_space<smem>>
      %cst_56 = arith.constant 0.000000e+00 : f32
      %c4_57 = arith.constant 4 : index
      %152 = memref.load %arg7[%c4_57] : memref<8xf32, #tpu.memory_space<smem>>
      memref.store %cst_56, %arg7[%c4_57] : memref<8xf32, #tpu.memory_space<smem>>
      %cst_58 = arith.constant 0.000000e+00 : f32
      %c5_59 = arith.constant 5 : index
      %153 = memref.load %arg7[%c5_59] : memref<8xf32, #tpu.memory_space<smem>>
      memref.store %cst_58, %arg7[%c5_59] : memref<8xf32, #tpu.memory_space<smem>>
      %cst_60 = arith.constant 0.000000e+00 : f32
      %c6_61 = arith.constant 6 : index
      %154 = memref.load %arg7[%c6_61] : memref<8xf32, #tpu.memory_space<smem>>
      memref.store %cst_60, %arg7[%c6_61] : memref<8xf32, #tpu.memory_space<smem>>
      %cst_62 = arith.constant 0.000000e+00 : f32
      %c7 = arith.constant 7 : index
      %155 = memref.load %arg7[%c7] : memref<8xf32, #tpu.memory_space<smem>>
      memref.store %cst_62, %arg7[%c7] : memref<8xf32, #tpu.memory_space<smem>>
    } else {
    }
    %c0 = arith.constant 0 : index
    %c0_1 = arith.constant 0 : index
    %3 = vector.load %arg2[%c0, %c0_1] : memref<8x5xf32, #tpu.memory_space<vmem>>, vector<8x5xf32>
    %c0_2 = arith.constant 0 : index
    %c0_3 = arith.constant 0 : index
    %4 = vector.load %arg3[%c0_2, %c0_3] : memref<8x4xf32, #tpu.memory_space<vmem>>, vector<8x4xf32>
    %c0_4 = arith.constant 0 : index
    %c0_5 = arith.constant 0 : index
    %5 = vector.load %arg4[%c0_4, %c0_5] : memref<8x2xi32, #tpu.memory_space<vmem>>, vector<8x2xi32>
    %c0_6 = arith.constant 0 : index
    %c0_7 = arith.constant 0 : index
    %6 = vector.load %arg5[%c0_6, %c0_7] : memref<8x5xf32, #tpu.memory_space<vmem>>, vector<8x5xf32>
    %c8_i32 = arith.constant 8 : i32
    %7 = arith.muli %arg0, %c8_i32 : i32
    %8 = tpu.iota {dimensions = array<i32: 0>} : vector<8x1xi32>
    %9 = vector.broadcast %7 : i32 to vector<8x1xi32>
    %10 = arith.addi %9, %8 : vector<8x1xi32>
    %c8_i32_8 = arith.constant 8 : i32
    %11 = vector.broadcast %c8_i32_8 : i32 to vector<8x1xi32>
    %12 = arith.cmpi slt, %10, %11 : vector<8x1xi32>
    %13 = tpu.iota {dimensions = array<i32: 1>} : vector<8x5xi32>
    %14 = vector.extract_strided_slice %5 {offsets = [0, 0], sizes = [8, 1], strides = [1, 1]} : vector<8x2xi32> to vector<8x1xi32>
    %cst = arith.constant dense<0xFF800000> : vector<8xf32>
    %15 = vector.multi_reduction <maximumf>, %3, %cst [1] : vector<8x5xf32> to vector<8xf32>
    %16 = vector.shape_cast %15 : vector<8xf32> to vector<8x1xf32>
    %17 = vector.broadcast %16 : vector<8x1xf32> to vector<8x5xf32>
    %18 = arith.subf %3, %17 : vector<8x5xf32>
    %19 = math.exp %18 : vector<8x5xf32>
    %cst_9 = arith.constant dense<0.000000e+00> : vector<8xf32>
    %20 = vector.multi_reduction <add>, %19, %cst_9 [1] : vector<8x5xf32> to vector<8xf32>
    %21 = vector.shape_cast %20 : vector<8xf32> to vector<8x1xf32>
    %22 = math.log %21 : vector<8x1xf32>
    %23 = arith.addf %16, %22 : vector<8x1xf32>
    %24 = vector.broadcast %14 : vector<8x1xi32> to vector<8x5xi32>
    %25 = arith.cmpi eq, %13, %24 : vector<8x5xi32>
    %cst_10 = arith.constant 0.000000e+00 : f32
    %26 = vector.broadcast %cst_10 : f32 to vector<8x5xf32>
    %27 = arith.select %25, %3, %26 : vector<8x5xi1>, vector<8x5xf32>
    %cst_11 = arith.constant dense<0.000000e+00> : vector<8xf32>
    %28 = vector.multi_reduction <add>, %27, %cst_11 [1] : vector<8x5xf32> to vector<8xf32>
    %29 = vector.shape_cast %28 : vector<8xf32> to vector<8x1xf32>
    %30 = arith.subf %23, %29 : vector<8x1xf32>
    %cst_12 = arith.constant 0.000000e+00 : f32
    %31 = vector.broadcast %cst_12 : f32 to vector<8x1xf32>
    %32 = arith.select %12, %30, %31 : vector<8x1xi1>, vector<8x1xf32>
    %33 = vector.shape_cast %32 : vector<8x1xf32> to vector<1x8x1xf32>
    %cst_13 = arith.constant dense<0.000000e+00> : vector<1xf32>
    %34 = vector.multi_reduction <add>, %33, %cst_13 [1, 2] : vector<1x8x1xf32> to vector<1xf32>
    %35 = vector.shape_cast %34 : vector<1xf32> to vector<1x1x1xf32>
    %36 = vector.extract %35[0, 0, 0] : f32 from vector<1x1x1xf32>
    %37 = vector.extract_strided_slice %5 {offsets = [0, 1], sizes = [8, 1], strides = [1, 1]} : vector<8x2xi32> to vector<8x1xi32>
    %38 = vector.extract_strided_slice %13 {offsets = [0, 0], sizes = [8, 4], strides = [1, 1]} : vector<8x5xi32> to vector<8x4xi32>
    %cst_14 = arith.constant dense<0xFF800000> : vector<8xf32>
    %39 = vector.multi_reduction <maximumf>, %4, %cst_14 [1] : vector<8x4xf32> to vector<8xf32>
    %40 = vector.shape_cast %39 : vector<8xf32> to vector<8x1xf32>
    %41 = vector.broadcast %40 : vector<8x1xf32> to vector<8x4xf32>
    %42 = arith.subf %4, %41 : vector<8x4xf32>
    %43 = math.exp %42 : vector<8x4xf32>
    %cst_15 = arith.constant dense<0.000000e+00> : vector<8xf32>
    %44 = vector.multi_reduction <add>, %43, %cst_15 [1] : vector<8x4xf32> to vector<8xf32>
    %45 = vector.shape_cast %44 : vector<8xf32> to vector<8x1xf32>
    %46 = math.log %45 : vector<8x1xf32>
    %47 = arith.addf %40, %46 : vector<8x1xf32>
    %48 = vector.broadcast %37 : vector<8x1xi32> to vector<8x4xi32>
    %49 = arith.cmpi eq, %38, %48 : vector<8x4xi32>
    %cst_16 = arith.constant 0.000000e+00 : f32
    %50 = vector.broadcast %cst_16 : f32 to vector<8x4xf32>
    %51 = arith.select %49, %4, %50 : vector<8x4xi1>, vector<8x4xf32>
    %cst_17 = arith.constant dense<0.000000e+00> : vector<8xf32>
    %52 = vector.multi_reduction <add>, %51, %cst_17 [1] : vector<8x4xf32> to vector<8xf32>
    %53 = vector.shape_cast %52 : vector<8xf32> to vector<8x1xf32>
    %54 = arith.subf %47, %53 : vector<8x1xf32>
    %cst_18 = arith.constant 0.000000e+00 : f32
    %55 = vector.broadcast %cst_18 : f32 to vector<8x1xf32>
    %56 = arith.select %12, %54, %55 : vector<8x1xi1>, vector<8x1xf32>
    %57 = vector.shape_cast %56 : vector<8x1xf32> to vector<1x8x1xf32>
    %cst_19 = arith.constant dense<0.000000e+00> : vector<1xf32>
    %58 = vector.multi_reduction <add>, %57, %cst_19 [1, 2] : vector<1x8x1xf32> to vector<1xf32>
    %59 = vector.shape_cast %58 : vector<1xf32> to vector<1x1x1xf32>
    %60 = vector.extract %59[0, 0, 0] : f32 from vector<1x1x1xf32>
    %61 = vector.extract_strided_slice %6 {offsets = [0, 0], sizes = [8, 1], strides = [1, 1]} : vector<8x5xf32> to vector<8x1xf32>
    %62 = vector.extract_strided_slice %6 {offsets = [0, 1], sizes = [8, 1], strides = [1, 1]} : vector<8x5xf32> to vector<8x1xf32>
    %63 = vector.extract_strided_slice %6 {offsets = [0, 2], sizes = [8, 1], strides = [1, 1]} : vector<8x5xf32> to vector<8x1xf32>
    %64 = vector.extract_strided_slice %6 {offsets = [0, 3], sizes = [8, 1], strides = [1, 1]} : vector<8x5xf32> to vector<8x1xf32>
    %65 = vector.extract_strided_slice %6 {offsets = [0, 4], sizes = [8, 1], strides = [1, 1]} : vector<8x5xf32> to vector<8x1xf32>
    %66 = arith.subf %61, %62 : vector<8x1xf32>
    %67 = arith.mulf %66, %66 : vector<8x1xf32>
    %cst_20 = arith.constant 0.000000e+00 : f32
    %68 = vector.broadcast %cst_20 : f32 to vector<8x1xf32>
    %69 = arith.select %12, %67, %68 : vector<8x1xi1>, vector<8x1xf32>
    %70 = vector.shape_cast %69 : vector<8x1xf32> to vector<1x8x1xf32>
    %cst_21 = arith.constant dense<0.000000e+00> : vector<1xf32>
    %71 = vector.multi_reduction <add>, %70, %cst_21 [1, 2] : vector<1x8x1xf32> to vector<1xf32>
    %72 = vector.shape_cast %71 : vector<1xf32> to vector<1x1x1xf32>
    %73 = vector.extract %72[0, 0, 0] : f32 from vector<1x1x1xf32>
    %cst_22 = arith.constant 0.000000e+00 : f32
    %74 = vector.broadcast %cst_22 : f32 to vector<8x1xf32>
    %75 = arith.maximumf %66, %74 : vector<8x1xf32>
    %cst_23 = arith.constant 2.000000e-01 : f32
    %76 = vector.broadcast %cst_23 : f32 to vector<8x1xf32>
    %77 = arith.mulf %76, %65 : vector<8x1xf32>
    %78 = arith.cmpf ogt, %75, %77 : vector<8x1xf32>
    %79 = arith.extui %78 : vector<8x1xi1> to vector<8x1xi32>
    %80 = arith.sitofp %79 : vector<8x1xi32> to vector<8x1xf32>
    %cst_24 = arith.constant 2.000000e+00 : f32
    %81 = vector.broadcast %cst_24 : f32 to vector<8x1xf32>
    %82 = arith.mulf %81, %80 : vector<8x1xf32>
    %cst_25 = arith.constant 1.000000e+00 : f32
    %83 = vector.broadcast %cst_25 : f32 to vector<8x1xf32>
    %84 = arith.addf %83, %82 : vector<8x1xf32>
    %85 = arith.mulf %84, %75 : vector<8x1xf32>
    %cst_26 = arith.constant 0.000000e+00 : f32
    %86 = vector.broadcast %cst_26 : f32 to vector<8x1xf32>
    %87 = arith.cmpf ogt, %63, %86 : vector<8x1xf32>
    %cst_27 = arith.constant 0.000000e+00 : f32
    %88 = vector.broadcast %cst_27 : f32 to vector<8x1xf32>
    %89 = arith.cmpf ogt, %64, %88 : vector<8x1xf32>
    %90 = arith.ori %87, %89 : vector<8x1xi1>
    %91 = arith.extui %90 : vector<8x1xi1> to vector<8x1xi32>
    %92 = arith.sitofp %91 : vector<8x1xi32> to vector<8x1xf32>
    %cst_28 = arith.constant 1.500000e+00 : f32
    %93 = vector.broadcast %cst_28 : f32 to vector<8x1xf32>
    %94 = arith.mulf %93, %92 : vector<8x1xf32>
    %cst_29 = arith.constant 1.000000e+00 : f32
    %95 = vector.broadcast %cst_29 : f32 to vector<8x1xf32>
    %96 = arith.addf %95, %94 : vector<8x1xf32>
    %97 = arith.mulf %96, %85 : vector<8x1xf32>
    %cst_30 = arith.constant 0.000000e+00 : f32
    %98 = vector.broadcast %cst_30 : f32 to vector<8x1xf32>
    %99 = arith.select %12, %97, %98 : vector<8x1xi1>, vector<8x1xf32>
    %100 = vector.shape_cast %99 : vector<8x1xf32> to vector<1x8x1xf32>
    %cst_31 = arith.constant dense<0.000000e+00> : vector<1xf32>
    %101 = vector.multi_reduction <add>, %100, %cst_31 [1, 2] : vector<1x8x1xf32> to vector<1xf32>
    %102 = vector.shape_cast %101 : vector<1xf32> to vector<1x1x1xf32>
    %103 = vector.extract %102[0, 0, 0] : f32 from vector<1x1x1xf32>
    %104 = arith.addf %63, %64 : vector<8x1xf32>
    %105 = arith.mulf %96, %104 : vector<8x1xf32>
    %cst_32 = arith.constant 0.000000e+00 : f32
    %106 = vector.broadcast %cst_32 : f32 to vector<8x1xf32>
    %107 = arith.select %12, %105, %106 : vector<8x1xi1>, vector<8x1xf32>
    %108 = vector.shape_cast %107 : vector<8x1xf32> to vector<1x8x1xf32>
    %cst_33 = arith.constant dense<0.000000e+00> : vector<1xf32>
    %109 = vector.multi_reduction <add>, %108, %cst_33 [1, 2] : vector<1x8x1xf32> to vector<1xf32>
    %110 = vector.shape_cast %109 : vector<1xf32> to vector<1x1x1xf32>
    %111 = vector.extract %110[0, 0, 0] : f32 from vector<1x1x1xf32>
    %cst_34 = arith.constant 0.000000e+00 : f32
    %112 = vector.broadcast %cst_34 : f32 to vector<8x1xf32>
    %113 = arith.select %12, %63, %112 : vector<8x1xi1>, vector<8x1xf32>
    %114 = vector.shape_cast %113 : vector<8x1xf32> to vector<1x8x1xf32>
    %cst_35 = arith.constant dense<0.000000e+00> : vector<1xf32>
    %115 = vector.multi_reduction <add>, %114, %cst_35 [1, 2] : vector<1x8x1xf32> to vector<1xf32>
    %116 = vector.shape_cast %115 : vector<1xf32> to vector<1x1x1xf32>
    %117 = vector.extract %116[0, 0, 0] : f32 from vector<1x1x1xf32>
    %cst_36 = arith.constant 0.000000e+00 : f32
    %118 = vector.broadcast %cst_36 : f32 to vector<8x1xf32>
    %119 = arith.select %12, %64, %118 : vector<8x1xi1>, vector<8x1xf32>
    %120 = vector.shape_cast %119 : vector<8x1xf32> to vector<1x8x1xf32>
    %cst_37 = arith.constant dense<0.000000e+00> : vector<1xf32>
    %121 = vector.multi_reduction <add>, %120, %cst_37 [1, 2] : vector<1x8x1xf32> to vector<1xf32>
    %122 = vector.shape_cast %121 : vector<1xf32> to vector<1x1x1xf32>
    %123 = vector.extract %122[0, 0, 0] : f32 from vector<1x1x1xf32>
    %c0_38 = arith.constant 0 : index
    %124 = memref.load %arg7[%c0_38] : memref<8xf32, #tpu.memory_space<smem>>
    %125 = arith.addf %124, %36 : f32
    %c0_39 = arith.constant 0 : index
    %126 = memref.load %arg7[%c0_39] : memref<8xf32, #tpu.memory_space<smem>>
    memref.store %125, %arg7[%c0_39] : memref<8xf32, #tpu.memory_space<smem>>
    %c1 = arith.constant 1 : index
    %127 = memref.load %arg7[%c1] : memref<8xf32, #tpu.memory_space<smem>>
    %128 = arith.addf %127, %60 : f32
    %c1_40 = arith.constant 1 : index
    %129 = memref.load %arg7[%c1_40] : memref<8xf32, #tpu.memory_space<smem>>
    memref.store %128, %arg7[%c1_40] : memref<8xf32, #tpu.memory_space<smem>>
    %c2 = arith.constant 2 : index
    %130 = memref.load %arg7[%c2] : memref<8xf32, #tpu.memory_space<smem>>
    %131 = arith.addf %130, %73 : f32
    %c2_41 = arith.constant 2 : index
    %132 = memref.load %arg7[%c2_41] : memref<8xf32, #tpu.memory_space<smem>>
    memref.store %131, %arg7[%c2_41] : memref<8xf32, #tpu.memory_space<smem>>
    %c3 = arith.constant 3 : index
    %133 = memref.load %arg7[%c3] : memref<8xf32, #tpu.memory_space<smem>>
    %134 = arith.addf %133, %103 : f32
    %c3_42 = arith.constant 3 : index
    %135 = memref.load %arg7[%c3_42] : memref<8xf32, #tpu.memory_space<smem>>
    memref.store %134, %arg7[%c3_42] : memref<8xf32, #tpu.memory_space<smem>>
    %c4 = arith.constant 4 : index
    %136 = memref.load %arg7[%c4] : memref<8xf32, #tpu.memory_space<smem>>
    %137 = arith.addf %136, %111 : f32
    %c4_43 = arith.constant 4 : index
    %138 = memref.load %arg7[%c4_43] : memref<8xf32, #tpu.memory_space<smem>>
    memref.store %137, %arg7[%c4_43] : memref<8xf32, #tpu.memory_space<smem>>
    %c5 = arith.constant 5 : index
    %139 = memref.load %arg7[%c5] : memref<8xf32, #tpu.memory_space<smem>>
    %140 = arith.addf %139, %117 : f32
    %c5_44 = arith.constant 5 : index
    %141 = memref.load %arg7[%c5_44] : memref<8xf32, #tpu.memory_space<smem>>
    memref.store %140, %arg7[%c5_44] : memref<8xf32, #tpu.memory_space<smem>>
    %c6 = arith.constant 6 : index
    %142 = memref.load %arg7[%c6] : memref<8xf32, #tpu.memory_space<smem>>
    %143 = arith.addf %142, %123 : f32
    %c6_45 = arith.constant 6 : index
    %144 = memref.load %arg7[%c6_45] : memref<8xf32, #tpu.memory_space<smem>>
    memref.store %143, %arg7[%c6_45] : memref<8xf32, #tpu.memory_space<smem>>
    %c0_i32_46 = arith.constant 0 : i32
    %145 = arith.cmpi eq, %arg0, %c0_i32_46 : i32
    %146 = arith.extui %145 : i1 to i32
    %c0_i32_47 = arith.constant 0 : i32
    %147 = arith.cmpi ne, %146, %c0_i32_47 : i32
    scf.if %147 {
      %c0_48 = arith.constant 0 : index
      %148 = memref.load %arg1[%c0_48] : memref<3xf32, #tpu.memory_space<smem>>
      %c1_49 = arith.constant 1 : index
      %149 = memref.load %arg1[%c1_49] : memref<3xf32, #tpu.memory_space<smem>>
      %c2_50 = arith.constant 2 : index
      %150 = memref.load %arg1[%c2_50] : memref<3xf32, #tpu.memory_space<smem>>
      %c0_51 = arith.constant 0 : index
      %151 = memref.load %arg7[%c0_51] : memref<8xf32, #tpu.memory_space<smem>>
      %cst_52 = arith.constant 1.250000e-01 : f32
      %152 = arith.mulf %151, %cst_52 : f32
      %c1_53 = arith.constant 1 : index
      %153 = memref.load %arg7[%c1_53] : memref<8xf32, #tpu.memory_space<smem>>
      %cst_54 = arith.constant 1.250000e-01 : f32
      %154 = arith.mulf %153, %cst_54 : f32
      %c2_55 = arith.constant 2 : index
      %155 = memref.load %arg7[%c2_55] : memref<8xf32, #tpu.memory_space<smem>>
      %cst_56 = arith.constant 1.250000e-01 : f32
      %156 = arith.mulf %155, %cst_56 : f32
      %c3_57 = arith.constant 3 : index
      %157 = memref.load %arg7[%c3_57] : memref<8xf32, #tpu.memory_space<smem>>
      %cst_58 = arith.constant 1.250000e-01 : f32
      %158 = arith.mulf %157, %cst_58 : f32
      %c4_59 = arith.constant 4 : index
      %159 = memref.load %arg7[%c4_59] : memref<8xf32, #tpu.memory_space<smem>>
      %cst_60 = arith.constant 1.250000e-01 : f32
      %160 = arith.mulf %159, %cst_60 : f32
      %161 = arith.addf %152, %154 : f32
      %162 = arith.addf %161, %156 : f32
      %163 = arith.mulf %148, %162 : f32
      %164 = arith.mulf %149, %158 : f32
      %165 = arith.addf %163, %164 : f32
      %166 = arith.mulf %150, %160 : f32
      %167 = arith.addf %165, %166 : f32
      %c0_61 = arith.constant 0 : index
      %168 = memref.load %arg6[%c0_61] : memref<8xf32, #tpu.memory_space<smem>>
      memref.store %167, %arg6[%c0_61] : memref<8xf32, #tpu.memory_space<smem>>
      %c1_62 = arith.constant 1 : index
      %169 = memref.load %arg6[%c1_62] : memref<8xf32, #tpu.memory_space<smem>>
      memref.store %152, %arg6[%c1_62] : memref<8xf32, #tpu.memory_space<smem>>
      %c2_63 = arith.constant 2 : index
      %170 = memref.load %arg6[%c2_63] : memref<8xf32, #tpu.memory_space<smem>>
      memref.store %154, %arg6[%c2_63] : memref<8xf32, #tpu.memory_space<smem>>
      %c3_64 = arith.constant 3 : index
      %171 = memref.load %arg6[%c3_64] : memref<8xf32, #tpu.memory_space<smem>>
      memref.store %156, %arg6[%c3_64] : memref<8xf32, #tpu.memory_space<smem>>
      %c5_65 = arith.constant 5 : index
      %172 = memref.load %arg7[%c5_65] : memref<8xf32, #tpu.memory_space<smem>>
      %cst_66 = arith.constant 1.250000e-01 : f32
      %173 = arith.mulf %172, %cst_66 : f32
      %c4_67 = arith.constant 4 : index
      %174 = memref.load %arg6[%c4_67] : memref<8xf32, #tpu.memory_space<smem>>
      memref.store %173, %arg6[%c4_67] : memref<8xf32, #tpu.memory_space<smem>>
      %c6_68 = arith.constant 6 : index
      %175 = memref.load %arg7[%c6_68] : memref<8xf32, #tpu.memory_space<smem>>
      %cst_69 = arith.constant 1.250000e-01 : f32
      %176 = arith.mulf %175, %cst_69 : f32
      %c5_70 = arith.constant 5 : index
      %177 = memref.load %arg6[%c5_70] : memref<8xf32, #tpu.memory_space<smem>>
      memref.store %176, %arg6[%c5_70] : memref<8xf32, #tpu.memory_space<smem>>
      %c6_71 = arith.constant 6 : index
      %178 = memref.load %arg6[%c6_71] : memref<8xf32, #tpu.memory_space<smem>>
      memref.store %149, %arg6[%c6_71] : memref<8xf32, #tpu.memory_space<smem>>
      %c7 = arith.constant 7 : index
      %179 = memref.load %arg6[%c7] : memref<8xf32, #tpu.memory_space<smem>>
      memref.store %150, %arg6[%c7] : memref<8xf32, #tpu.memory_space<smem>>
    } else {
    }
    return
  }
  func.func @transform_0(%arg0: i32) -> i32 {
    %c0_i32 = arith.constant 0 : i32
    %c0_i32_0 = arith.constant 0 : i32
    return %c0_i32 : i32
  }
  func.func @transform_1(%arg0: i32) -> (i32, i32) {
    %c0_i32 = arith.constant 0 : i32
    %c0_i32_0 = arith.constant 0 : i32
    return %arg0, %c0_i32 : i32, i32
  }
  func.func @transform_2(%arg0: i32) -> (i32, i32) {
    %c0_i32 = arith.constant 0 : i32
    %c0_i32_0 = arith.constant 0 : i32
    return %arg0, %c0_i32 : i32, i32
  }
  func.func @transform_3(%arg0: i32) -> (i32, i32) {
    %c0_i32 = arith.constant 0 : i32
    %c0_i32_0 = arith.constant 0 : i32
    return %arg0, %c0_i32 : i32, i32
  }
  func.func @transform_4(%arg0: i32) -> (i32, i32) {
    %c0_i32 = arith.constant 0 : i32
    %c0_i32_0 = arith.constant 0 : i32
    return %arg0, %c0_i32 : i32, i32
  }
  func.func @transform_5(%arg0: i32) -> i32 {
    %c0_i32 = arith.constant 0 : i32
    %c0_i32_0 = arith.constant 0 : i32
    return %c0_i32 : i32
  }
}

</mosaic_0001>

<llo_original>
// kernel: tpu_custom_call.1
$region0: #{tpu_custom_call.1}
  #allocation0 [shape = 'u32[]', space=smem, size = 0x4, offset = 0x4, fixed_abs, tag = 'smem constant byte address 0x4 - core index']
  #allocation1 [shape = 'u32[144,128]{1,0:T(1,128)}', space=vmem, size = 0x12000, scoped, tag = 'internal scratch']
  #allocation2 [shape = 'f32[8]{0:T(128)}', space=smem, size = 0x200, scoped, tag = 'scratch operand']
  %s0 = inlined_call_operand.vmem [shape: f32[3], index: 0, kind: input, shape index: {}]
  %s1 = inlined_call_operand.vmem [shape: f32[8,5], index: 1, kind: input, shape index: {}]
  %s2 = inlined_call_operand.vmem [shape: f32[8,4], index: 2, kind: input, shape index: {}]
  %s3 = inlined_call_operand.vmem [shape: s32[8,2], index: 3, kind: input, shape index: {}]
  %s4 = inlined_call_operand.vmem [shape: f32[8,5], index: 4, kind: input, shape index: {}]
  %s5 = inlined_call_operand.hbm [shape: f32[8], index: 5, kind: output, shape index: {}]
  %s6 = sld [smem:[#allocation0]]
  $region42: #{tpu_custom_call.1} parent=0
    _
  %s8 = ssub.s32 1, %s6
  %s9 = scalar_select 0, %s8, %s6
  $region1: #{tpu_custom_call.1} parent=0
    #allocation3 [shape = 'u8[512]{0}', space=smem, size = 0x200, scoped, tag = 'input window, operand 0, single buffered']
    #allocation4 [shape = 's32[1]{0}', space=sflag, size = 0x4, scoped, tag = 'scoped memory for tpu_custom_call.1']
    #allocation5 [shape = 's32[1]{0}', space=sflag, size = 0x4, scoped, tag = 'scoped memory for tpu_custom_call.1']
    #allocation6 [shape = 'u8[512]{0}', space=smem, size = 0x200, scoped, tag = 'output window, operand 0, single buffered']
    %10 = vsyncpa [#allocation5], 0
    %11 = vsyncpa [#allocation4], 0
    // Predicated region
    $region2: #{tpu_custom_call.1} parent=1 // pred_check
      _
    $region3: #{tpu_custom_call.1} parent=1 // pred_check_branch
      %13 = sbr.rel (0) target = $region5
    $region4: #{tpu_custom_call.1} parent=1 // pred_region
      %s15 = ssub.s32 16, 16
      %16 = vsyncadd [#allocation5], %s15
      %s18 = sshll.u32 %s0, 4
      %s19 = int_to_ptr.vmem [resolvable:$true] %s18
      %21 = dma.vmem_to_smem %s19, 16, [#allocation3], [#allocation5]
    $region5: #{tpu_custom_call.1} parent=1 // pred_fallthru
      _
    // Predicated region
    $region6: #{tpu_custom_call.1} parent=1 // pred_check
      _
    $region7: #{tpu_custom_call.1} parent=1 // pred_check_branch
      %23 = sbr.rel (0) target = $region9
    $region8: #{tpu_custom_call.1} parent=1 // pred_region
      _
    $region9: #{tpu_custom_call.1} parent=1 // pred_fallthru
      _
    // Predicated region
    $region10: #{tpu_custom_call.1} parent=1 // pred_check
      _
    $region11: #{tpu_custom_call.1} parent=1 // pred_check_branch
      %25 = sbr.rel (0) target = $region13
    $region12: #{tpu_custom_call.1} parent=1 // pred_region
      _
    $region13: #{tpu_custom_call.1} parent=1 // pred_fallthru
      _
    // Predicated region
    $region14: #{tpu_custom_call.1} parent=1 // pred_check
      _
    $region15: #{tpu_custom_call.1} parent=1 // pred_check_branch
      %27 = sbr.rel (0) target = $region17
    $region16: #{tpu_custom_call.1} parent=1 // pred_region
      _
    $region17: #{tpu_custom_call.1} parent=1 // pred_fallthru
      _
    // Predicated region
    $region18: #{tpu_custom_call.1} parent=1 // pred_check
      _
    $region19: #{tpu_custom_call.1} parent=1 // pred_check_branch
      %29 = sbr.rel (0) target = $region21
    $region20: #{tpu_custom_call.1} parent=1 // pred_region
      _
    $region21: #{tpu_custom_call.1} parent=1 // pred_fallthru
      _
    // Predicated region
    $region22: #{tpu_custom_call.1} parent=1 // pred_check
      _
    $region23: #{tpu_custom_call.1} parent=1 // pred_check_branch
      %31 = sbr.rel (0) target = $region25
    $region24: #{tpu_custom_call.1} parent=1 // pred_region
      %32 = dma.done [#allocation5], 16
    $region25: #{tpu_custom_call.1} parent=1 // pred_fallthru
      _
    %33 = sfence
    %p34 = scmp.eq.s32.totalorder 0, 0
    // Predicated region
    $region26: #{tpu_custom_call.1} parent=1 // pred_check
      %p35 = pneg %p34
    $region27: #{tpu_custom_call.1} parent=1 // pred_check_branch
      %37 = sbr.rel (%p35) target = $region29
    $region28: #{tpu_custom_call.1} parent=1 // pred_region
      %s38 = scalar_lea.smem [#allocation2], 0
      %39 = sst [smem:[%s38]] 0.0
      %s40 = scalar_lea.smem [#allocation2], 1
      %41 = sst [smem:[%s40]] 0.0
      %s42 = scalar_lea.smem [#allocation2], 2
      %43 = sst [smem:[%s42]] 0.0
      %s44 = scalar_lea.smem [#allocation2], 3
      %45 = sst [smem:[%s44]] 0.0
      %s46 = scalar_lea.smem [#allocation2], 4
      %47 = sst [smem:[%s46]] 0.0
      %s48 = scalar_lea.smem [#allocation2], 5
      %49 = sst [smem:[%s48]] 0.0
      %s50 = scalar_lea.smem [#allocation2], 6
      %51 = sst [smem:[%s50]] 0.0
      %s52 = scalar_lea.smem [#allocation2], 7
      %53 = sst [smem:[%s52]] 0.0
    $region29: #{tpu_custom_call.1} parent=1 // pred_fallthru
      _
    %v54 = vld [vmem:[%s1] sm:$0xff]
    %v55 = vld [vmem:[%s2] sm:$0xff]
    %v56 = vld [vmem:[%s3] sm:$0xff]
    %v57 = vld [vmem:[%s4] sm:$0xff]
    %s58 = smul.u32 0, 8
    %v59 = vlaneseq
    %v60 = vshrl.u32 %v59, 7
    %v61 = vstv %s58
    %v62 = vadd.s32 %v61, %v60
    %vm63 = vcmp.lt.s32.totalorder %v62, 8
    %v64 = vlaneseq
    %v65 = vand.u32 %v64, 127
    %vm66 = vcmask 39936
    %v67 = vsel %vm66, %v54, -inf
    %68 = vmax.xlane.f32.xlu0 %v67
    %v69 = vpop.xlane.xlu0 %68
    %v70 = vsub.f32 %v54, %v69
    %v71 = vmul.f32 %v70, 1.442695
    %v72 = vpow.pop %v71
    %v73 = vsel %vm66, %v72, 0.0
    %74 = vadd.xlane.f32.xlu0 %v73
    %v75 = vpop.xlane.xlu0 %74
    %v76 = vlog2.pop %v75
    %v77 = vmul.f32 %v76, 0.6931472
    %v78 = vadd.f32 %v69, %v77
    %79 = vset.pattern.permute.xlu0 0
    %80 = vperm.xlu0 %79, %v56
    %v81 = vpop.permute.xlu0 %80
    %vm82 = vcmp.eq.s32.totalorder %v65, %v81
    %v83 = vsel %vm82, %v54, 0.0
    %v84 = vsel %vm66, %v83, 0.0
    %85 = vadd.xlane.f32.xlu0 %v84
    %v86 = vpop.xlane.xlu0 %85
    %v87 = vsub.f32 %v78, %v86
    %v88 = vsel %vm63, %v87, 0.0
    %vm89 = vcmask 7168
    %v90 = vsel %vm89, %v88, 0.0
    %91 = vadd.xlane.f32.xlu0 %v90
    %v92 = vpop.xlane.xlu0 %91
    %v93 = vrot.slane %v92, 4
    %v94 = vadd.f32 %v92, %v93
    %v95 = vrot.slane %v94, 2
    %v96 = vadd.f32 %v94, %v95
    %v97 = vrot.slane %v96, 1
    %v98 = vadd.f32 %v96, %v97
    %s99 = vtos %v98
    %vm100 = vcmask 31744
    %v101 = vsel %vm100, %v55, -inf
    %102 = vmax.xlane.f32.xlu0 %v101
    %v103 = vpop.xlane.xlu0 %102
    %v104 = vsub.f32 %v55, %v103
    %v105 = vmul.f32 %v104, 1.442695
    %v106 = vpow.pop %v105
    %v107 = vsel %vm100, %v106, 0.0
    %108 = vadd.xlane.f32.xlu0 %v107
    %v109 = vpop.xlane.xlu0 %108
    %v110 = vlog2.pop %v109
    %v111 = vmul.f32 %v110, 0.6931472
    %v112 = vadd.f32 %v103, %v111
    %113 = vset.pattern.permute.xlu0 1
    %114 = vperm.xlu0 %113, %v56
    %v115 = vpop.permute.xlu0 %114
    %vm116 = vcmp.eq.s32.totalorder %v65, %v115
    %v117 = vsel %vm116, %v55, 0.0
    %v118 = vsel %vm100, %v117, 0.0
    %119 = vadd.xlane.f32.xlu0 %v118
    %v120 = vpop.xlane.xlu0 %119
    %v121 = vsub.f32 %v112, %v120
    %v122 = vsel %vm63, %v121, 0.0
    %v123 = vsel %vm89, %v122, 0.0
    %124 = vadd.xlane.f32.xlu0 %v123
    %v125 = vpop.xlane.xlu0 %124
    %v126 = vrot.slane %v125, 4
    %v127 = vadd.f32 %v125, %v126
    %v128 = vrot.slane %v127, 2
    %v129 = vadd.f32 %v127, %v128
    %v130 = vrot.slane %v129, 1
    %v131 = vadd.f32 %v129, %v130
    %s132 = vtos %v131
    %134 = vrot.lane.b32.xlu0 %v57, 127
    %v135 = vpop.permute.xlu0 %134
    %v137 = vsub.f32 %v57, %v135
    %v138 = vmul.f32 %v137, %v137
    %v139 = vsel %vm63, %v138, 0.0
    %v140 = vsel %vm89, %v139, 0.0
    %141 = vadd.xlane.f32.xlu0 %v140
    %v142 = vpop.xlane.xlu0 %141
    %v143 = vrot.slane %v142, 4
    %v144 = vadd.f32 %v142, %v143
    %v145 = vrot.slane %v144, 2
    %v146 = vadd.f32 %v144, %v145
    %v147 = vrot.slane %v146, 1
    %v148 = vadd.f32 %v146, %v147
    %s149 = vtos %v148
    %v150 = vmax.f32 %v137, 0.0
    %v151 = vmul.f32 %v57, 0.2
    %153 = vrot.lane.b32.xlu0 %v151, 124
    %v154 = vpop.permute.xlu0 %153
    %vm156 = vcmp.gt.f32.partialorder %v150, %v154
    %v157 = vsel %vm156, 1, 0
    %v158 = vcvt.s32.f32 %v157
    %v159 = vmul.f32 %v158, 2.0
    %v160 = vadd.f32 %v159, 1.0
    %v161 = vmul.f32 %v160, %v150
    %vm162 = vcmp.gt.f32.partialorder %v57, 0.0
    %v163 = vsel %vm162, 1, 0
    %164 = vrot.lane.b32.xlu0 %v163, 127
    %v165 = vpop.permute.xlu0 %164
    %vm166 = vcmp.ne.s32.totalorder %v165, 0
    %vm167 = vmor %vm162, %vm166
    %v168 = vsel %vm167, 1, 0
    %v169 = vcvt.s32.f32 %v168
    %v170 = vmul.f32 %v169, 1.5
    %v171 = vadd.f32 %v170, 1.0
    %173 = vrot.lane.b32.xlu0 %v161, 2
    %v174 = vpop.permute.xlu0 %173
    %v176 = vmul.f32 %v171, %v174
    %v177 = vsel %vm63, %v176, 0.0
    %179 = vrot.lane.b32.xlu0 %v177, 126
    %v180 = vpop.permute.xlu0 %179
    %v182 = vsel %vm89, %v180, 0.0
    %183 = vadd.xlane.f32.xlu0 %v182
    %v184 = vpop.xlane.xlu0 %183
    %v185 = vrot.slane %v184, 4
    %v186 = vadd.f32 %v184, %v185
    %v187 = vrot.slane %v186, 2
    %v188 = vadd.f32 %v186, %v187
    %v189 = vrot.slane %v188, 1
    %v190 = vadd.f32 %v188, %v189
    %s191 = vtos %v190
    %v192 = vadd.f32 %v57, %v135
    %v193 = vmul.f32 %v171, %v192
    %v194 = vsel %vm63, %v193, 0.0
    %196 = vrot.lane.b32.xlu0 %v194, 126
    %v197 = vpop.permute.xlu0 %196
    %v199 = vsel %vm89, %v197, 0.0
    %200 = vadd.xlane.f32.xlu0 %v199
    %v201 = vpop.xlane.xlu0 %200
    %v202 = vrot.slane %v201, 4
    %v203 = vadd.f32 %v201, %v202
    %v204 = vrot.slane %v203, 2
    %v205 = vadd.f32 %v203, %v204
    %v206 = vrot.slane %v205, 1
    %v207 = vadd.f32 %v205, %v206
    %s208 = vtos %v207
    %v209 = vsel %vm63, %v57, 0.0
    %211 = vrot.lane.b32.xlu0 %v209, 126
    %v212 = vpop.permute.xlu0 %211
    %v214 = vsel %vm89, %v212, 0.0
    %215 = vadd.xlane.f32.xlu0 %v214
    %v216 = vpop.xlane.xlu0 %215
    %v217 = vrot.slane %v216, 4
    %v218 = vadd.f32 %v216, %v217
    %v219 = vrot.slane %v218, 2
    %v220 = vadd.f32 %v218, %v219
    %v221 = vrot.slane %v220, 1
    %v222 = vadd.f32 %v220, %v221
    %s223 = vtos %v222
    %224 = vrot.lane.b32.xlu0 %v209, 125
    %v225 = vpop.permute.xlu0 %224
    %v227 = vsel %vm89, %v225, 0.0
    %228 = vadd.xlane.f32.xlu0 %v227
    %v229 = vpop.xlane.xlu0 %228
    %v230 = vrot.slane %v229, 4
    %v231 = vadd.f32 %v229, %v230
    %v232 = vrot.slane %v231, 2
    %v233 = vadd.f32 %v231, %v232
    %v234 = vrot.slane %v233, 1
    %v235 = vadd.f32 %v233, %v234
    %s236 = vtos %v235
    %s237 = sld [smem:[#allocation2]]
    %s238 = sadd.f32 %s237, %s99
    %s239 = scalar_lea.smem [#allocation2], 0
    %240 = sst [smem:[%s239]] %s238
    %s241 = sld [smem:[#allocation2 + $0x1]]
    %s242 = sadd.f32 %s241, %s132
    %s243 = scalar_lea.smem [#allocation2], 1
    %244 = sst [smem:[%s243]] %s242
    %s245 = sld [smem:[#allocation2 + $0x2]]
    %s246 = sadd.f32 %s245, %s149
    %s247 = scalar_lea.smem [#allocation2], 2
    %248 = sst [smem:[%s247]] %s246
    %s249 = sld [smem:[#allocation2 + $0x3]]
    %s250 = sadd.f32 %s249, %s191
    %s251 = scalar_lea.smem [#allocation2], 3
    %252 = sst [smem:[%s251]] %s250
    %s253 = sld [smem:[#allocation2 + $0x4]]
    %s254 = sadd.f32 %s253, %s208
    %s255 = scalar_lea.smem [#allocation2], 4
    %256 = sst [smem:[%s255]] %s254
    %s257 = sld [smem:[#allocation2 + $0x5]]
    %s258 = sadd.f32 %s257, %s223
    %s259 = scalar_lea.smem [#allocation2], 5
    %260 = sst [smem:[%s259]] %s258
    %s261 = sld [smem:[#allocation2 + $0x6]]
    %s262 = sadd.f32 %s261, %s236
    %s263 = scalar_lea.smem [#allocation2], 6
    %264 = sst [smem:[%s263]] %s262
    // Predicated region
    $region30: #{tpu_custom_call.1} parent=1 // pred_check
      %p265 = pneg %p34
    $region31: #{tpu_custom_call.1} parent=1 // pred_check_branch
      %267 = sbr.rel (%p265) target = $region33
    $region32: #{tpu_custom_call.1} parent=1 // pred_region
      %s268 = sld [smem:[#allocation3]]
      %s269 = sld [smem:[#allocation3 + $0x1]]
      %s270 = sld [smem:[#allocation3 + $0x2]]
      %s271 = sld [smem:[#allocation2]]
      %s272 = smul.f32 %s271, 0.125
      %s273 = sld [smem:[#allocation2 + $0x1]]
      %s274 = smul.f32 %s273, 0.125
      %s275 = sld [smem:[#allocation2 + $0x2]]
      %s276 = smul.f32 %s275, 0.125
      %s277 = sld [smem:[#allocation2 + $0x3]]
      %s278 = smul.f32 %s277, 0.125
      %s279 = sld [smem:[#allocation2 + $0x4]]
      %s280 = smul.f32 %s279, 0.125
      %s281 = sadd.f32 %s272, %s274
      %s282 = sadd.f32 %s281, %s276
      %s283 = smul.f32 %s268, %s282
      %s284 = smul.f32 %s269, %s278
      %s285 = sadd.f32 %s283, %s284
      %s286 = smul.f32 %s270, %s280
      %s287 = sadd.f32 %s285, %s286
      %s288 = scalar_lea.smem [#allocation6], 0
      %289 = sst [smem:[%s288]] %s287
      %s290 = scalar_lea.smem [#allocation6], 1
      %291 = sst [smem:[%s290]] %s272
      %s292 = scalar_lea.smem [#allocation6], 2
      %293 = sst [smem:[%s292]] %s274
      %s294 = scalar_lea.smem [#allocation6], 3
      %295 = sst [smem:[%s294]] %s276
      %s296 = sld [smem:[#allocation2 + $0x5]]
      %s297 = smul.f32 %s296, 0.125
      %s298 = scalar_lea.smem [#allocation6], 4
      %299 = sst [smem:[%s298]] %s297
      %s300 = sld [smem:[#allocation2 + $0x6]]
      %s301 = smul.f32 %s300, 0.125
      %s302 = scalar_lea.smem [#allocation6], 5
      %303 = sst [smem:[%s302]] %s301
      %s304 = scalar_lea.smem [#allocation6], 6
      %305 = sst [smem:[%s304]] %s269
      %s306 = scalar_lea.smem [#allocation6], 7
      %307 = sst [smem:[%s306]] %s270
    $region33: #{tpu_custom_call.1} parent=1 // pred_fallthru
      _
    // Predicated region
    $region34: #{tpu_custom_call.1} parent=1 // pred_check
      _
    $region35: #{tpu_custom_call.1} parent=1 // pred_check_branch
      %309 = sbr.rel (0) target = $region37
    $region36: #{tpu_custom_call.1} parent=1 // pred_region
      %s311 = ssub.s32 16, 16
      %312 = vsyncadd [#allocation4], %s311
      %315 = dma.smem_to_hbm [#allocation6], 16, %s5, [#allocation4]
    $region37: #{tpu_custom_call.1} parent=1 // pred_fallthru
      _
    // Predicated region
    $region38: #{tpu_custom_call.1} parent=1 // pred_check
      _
    $region39: #{tpu_custom_call.1} parent=1 // pred_check_branch
      %317 = sbr.rel (0) target = $region41
    $region40: #{tpu_custom_call.1} parent=1 // pred_region
      %318 = dma.done [#allocation4], 16
    $region41: #{tpu_custom_call.1} parent=1 // pred_fallthru
      _
    %319 = sfence
    %320 = vsyncpa [#allocation4], 1
    %321 = vsyncpa [#allocation5], 1

</llo_original>
